<compile_context>
chip_gen: v7x
topology: tpu7x:2x2x1
jax: 0.10.0
libtpu: 0.0.40
codegen_flags: <defaults>
</compile_context>

<pallas_src>
import math

import jax
import jax.numpy as jnp
from jax.experimental import pallas as pl
from jax.experimental.pallas import tpu as pltpu

# ---- constants matching the PyTorch module --------------------------------
W_PRIOR_SIGMA_1 = 1.0              # exp(0)
W_PRIOR_SIGMA_2 = math.exp(-4.0)
B_PRIOR_SIGMA_1 = 1.0
B_PRIOR_SIGMA_2 = math.exp(-6.0)
PRIOR_PI = 0.5
INV_SQRT_2PI = 1.0 / math.sqrt(2.0 * math.pi)
LOG_SQRT_2PI = math.log(math.sqrt(2.0 * math.pi))


# ---- shared elementwise math (used by both the kernels and the reference) --
def _softplus(x):
    # == torch.log1p(torch.exp(x)); rho is drawn in [-10, -9] so no overflow.
    return jnp.log(1.0 + jnp.exp(x))


def _mix_gaussian_log_prob(v, sigma1, sigma2):
    p1 = (INV_SQRT_2PI / sigma1) * jnp.exp(-(v * v) / (2.0 * sigma1 * sigma1))
    p2 = (INV_SQRT_2PI / sigma2) * jnp.exp(-(v * v) / (2.0 * sigma2 * sigma2))
    return jnp.log(PRIOR_PI * p1 + (1.0 - PRIOR_PI) * p2)


def _gaussian_log_posterior(v, mu, sigma):
    return -LOG_SQRT_2PI - jnp.log(sigma) - (v - mu) ** 2 / (2.0 * sigma * sigma)


def _sum_all(v):
    # 2-D -> (1, 1): lane reduce (XLU) then sublane reduce.
    return jnp.sum(jnp.sum(v, axis=-1, keepdims=True), axis=0, keepdims=True)


# ---- kernel 1: sample weights/bias + KL terms (runs once per forward) ------
def sample_stats_kernel(wmu_ref, wrho_ref, weps_ref, bmu_ref, brho_ref, beps_ref,
                        w_ref, b_ref, lp_ref, lq_ref):
    wmu, wrho, weps = wmu_ref[...], wrho_ref[...], weps_ref[...]
    bmu, brho, beps = bmu_ref[...], brho_ref[...], beps_ref[...]

    w_sigma = _softplus(wrho)
    b_sigma = _softplus(brho)
    w = wmu + w_sigma * weps           # sampled weight, (C_in, C_out), f32
    b = bmu + b_sigma * beps           # sampled bias,   (1, C_out),  f32

    # stats in f32; weight may be cast to bf16 for the mixed-precision matmul
    w_ref[...] = w.astype(w_ref.dtype)
    b_ref[...] = b.astype(b_ref.dtype)

    lp_ref[...] = (_sum_all(_mix_gaussian_log_prob(w, W_PRIOR_SIGMA_1, W_PRIOR_SIGMA_2))
                   + _sum_all(_mix_gaussian_log_prob(b, B_PRIOR_SIGMA_1, B_PRIOR_SIGMA_2)))
    lq_ref[...] = (_sum_all(_gaussian_log_posterior(w, wmu, w_sigma))
                   + _sum_all(_gaussian_log_posterior(b, bmu, b_sigma)))


# ---- kernel 2: batch-tiled linear (x @ W + b), lane-dense ------------------
def linear_kernel(x_ref, w_ref, b_ref, o_ref):
    x = x_ref[...]
    w = w_ref[...]
    if w.dtype == jnp.bfloat16:
        x = x.astype(jnp.bfloat16)     # MXU inputs bf16, accumulate f32
    acc = jnp.dot(x, w, preferred_element_type=jnp.float32)
    o_ref[...] = (acc + b_ref[...]).astype(o_ref.dtype)  # epilogue stays f32


# ---- wrapper ----------------------------------------------------------------
def _round_up(v, m):
    return ((v + m - 1) // m) * m


def _pick_batch_tile(batch):
    # Per review: grid over the batch; ~512-row tiles for large batches
    # (multiple of 8), full batch otherwise.  Keeps intermediates near vreg
    # capacity while amortizing per-grid-step overhead.
    if batch <= 512:
        return batch
    for t in (512, 256, 128, 64, 32, 16, 8):
        if batch % t == 0:
            return t
    return batch


def bayesian_layer_forward(x, params, eps_w, eps_b, *,
                           sample=True, batch_tile=None, use_bf16_matmul=False):
    """BayesianLayer.forward.

    x:      (B, C_in) float32
    params: weight_mu/weight_rho (C_out, C_in), bias_mu/bias_rho (C_out,)  (PyTorch layout)
    eps_w:  (C_in, C_out) standard-normal draw (transposed layout); ignored if sample=False
    eps_b:  (1, C_out)    standard-normal draw; ignored if sample=False
    Returns (out (B, C_out) f32, log_prior scalar, log_posterior scalar).
    calculate=False in the PyTorch module only skips the (cheap) stats; they are
    always returned here and can simply be ignored by the caller.
    """
    batch, c_in = x.shape
    c_out = params["weight_mu"].shape[0]

    # parameters in matmul-friendly (in, out) layout (one-time layout plumbing)
    wmu_t = params["weight_mu"].T.astype(jnp.float32)      # (C_in, C_out)
    wrho_t = params["weight_rho"].T.astype(jnp.float32)
    bmu = params["bias_mu"].reshape(1, c_out).astype(jnp.float32)
    brho = params["bias_rho"].reshape(1, c_out).astype(jnp.float32)

    if not sample:   # sample=False branch: weight = mu exactly (eps = 0)
        eps_w = jnp.zeros_like(wmu_t)
        eps_b = jnp.zeros_like(bmu)

    w_dtype = jnp.bfloat16 if use_bf16_matmul else jnp.float32

    # ---- kernel 1: sampling + KL reductions (single grid step) ----
    full2d = lambda shape: pl.BlockSpec(shape, lambda i: (0, 0))
    n_w = c_in * c_out
    sample_cost = pl.CostEstimate(
        flops=12 * (n_w + c_out),
        transcendentals=6 * (n_w + c_out),
        bytes_accessed=4 * (4 * n_w + 5 * c_out + 2) + n_w * (2 if use_bf16_matmul else 4),
    )
    w_s, b_s, log_prior, log_posterior = pl.pallas_call(
        sample_stats_kernel,
        out_shape=(
            jax.ShapeDtypeStruct((c_in, c_out), w_dtype),
            jax.ShapeDtypeStruct((1, c_out), jnp.float32),
            jax.ShapeDtypeStruct((1, 1), jnp.float32),
            jax.ShapeDtypeStruct((1, 1), jnp.float32),
        ),
        grid_spec=pltpu.PrefetchScalarGridSpec(
            num_scalar_prefetch=0,
            grid=(1,),
            in_specs=[
                full2d((c_in, c_out)), full2d((c_in, c_out)), full2d((c_in, c_out)),
                full2d((1, c_out)), full2d((1, c_out)), full2d((1, c_out)),
            ],
            out_specs=[
                full2d((c_in, c_out)), full2d((1, c_out)),
                full2d((1, 1)), full2d((1, 1)),
            ],
        ),
        compiler_params=pltpu.CompilerParams(
            dimension_semantics=("arbitrary",),
            vmem_limit_bytes=32 * 1024 * 1024),
        cost_estimate=sample_cost,
    )(wmu_t, wrho_t, eps_w, bmu, brho, eps_b)

    # ---- lane-dense zero padding (input K and output N up to multiples of 128)
    c_in_p = _round_up(c_in, 128)
    c_out_p = _round_up(c_out, 128)
    x_p = jnp.pad(x.astype(jnp.float32), ((0, 0), (0, c_in_p - c_in)))
    w_p = jnp.pad(w_s, ((0, c_in_p - c_in), (0, c_out_p - c_out)))
    b_p = jnp.pad(b_s, ((0, 0), (0, c_out_p - c_out)))

    if batch_tile is None:
        batch_tile = _pick_batch_tile(batch)
    assert batch % batch_tile == 0, "batch must be divisible by batch_tile"
    assert batch_tile % 8 == 0 or batch_tile == batch, \
        "batch_tile must be a multiple of 8 (sublane) or the full batch"
    n_tiles = batch // batch_tile

    w_bytes = c_in_p * c_out_p * (2 if use_bf16_matmul else 4)
    linear_cost = pl.CostEstimate(
        flops=2 * batch * c_in_p * c_out_p,
        transcendentals=0,
        bytes_accessed=4 * (batch * c_in_p + batch * c_out_p + c_out_p) + w_bytes,
    )

    out_p = pl.pallas_call(
        linear_kernel,
        out_shape=jax.ShapeDtypeStruct((batch, c_out_p), jnp.float32),
        grid_spec=pltpu.PrefetchScalarGridSpec(
            num_scalar_prefetch=0,
            grid=(n_tiles,),
            in_specs=[
                pl.BlockSpec((batch_tile, c_in_p), lambda i: (i, 0)),
                # weight/bias: constant index map -> stay VMEM-resident across the grid
                pl.BlockSpec((c_in_p, c_out_p), lambda i: (0, 0)),
                pl.BlockSpec((1, c_out_p), lambda i: (0, 0)),
            ],
            out_specs=pl.BlockSpec((batch_tile, c_out_p), lambda i: (i, 0)),
        ),
        compiler_params=pltpu.CompilerParams(
            dimension_semantics=("parallel",),   # batch tiles shard across TCs on v7x
            vmem_limit_bytes=32 * 1024 * 1024),
        cost_estimate=linear_cost,
    )(x_p, w_p, b_p)

    out = out_p[:, :c_out]
    return out, log_prior[0, 0], log_posterior[0, 0]


# ---- pure-JAX reference (mirrors the PyTorch math, same eps) ----------------
def reference_forward(x, params, eps_w, eps_b, *, sample=True):
    wmu_t = params["weight_mu"].T
    wrho_t = params["weight_rho"].T
    bmu = params["bias_mu"].reshape(1, -1)
    brho = params["bias_rho"].reshape(1, -1)
    if not sample:
        eps_w = jnp.zeros_like(wmu_t)
        eps_b = jnp.zeros_like(bmu)
    w_sigma = _softplus(wrho_t)
    b_sigma = _softplus(brho)
    w = wmu_t + w_sigma * eps_w
    b = bmu + b_sigma * eps_b
    log_prior = (jnp.sum(_mix_gaussian_log_prob(w, W_PRIOR_SIGMA_1, W_PRIOR_SIGMA_2))
                 + jnp.sum(_mix_gaussian_log_prob(b, B_PRIOR_SIGMA_1, B_PRIOR_SIGMA_2)))
    log_posterior = (jnp.sum(_gaussian_log_posterior(w, wmu_t, w_sigma))
                     + jnp.sum(_gaussian_log_posterior(b, bmu, b_sigma)))
    out = x @ w + b
    return out, log_prior, log_posterior


def init_params(key, channel_in, channel_out):
    """Mirrors BayesianLayer.__init__ parameter initialisation (PyTorch layout)."""
    k1, k2, k3, k4 = jax.random.split(key, 4)
    return {
        "weight_mu": jax.random.uniform(k1, (channel_out, channel_in), jnp.float32, -0.2, 0.2),
        "weight_rho": jax.random.uniform(k2, (channel_out, channel_in), jnp.float32, -10.0, -9.0),
        "bias_mu": jax.random.uniform(k3, (channel_out,), jnp.float32, -0.2, 0.2),
        "bias_rho": jax.random.uniform(k4, (channel_out,), jnp.float32, -10.0, -9.0),
    }


if __name__ == "__main__":
    key = jax.random.PRNGKey(0)
    k_params, k_x, k_ew, k_eb = jax.random.split(key, 4)

    batch, channel_in, channel_out = 16, 32, 64
    params = init_params(k_params, channel_in, channel_out)
    x = jax.random.normal(k_x, (batch, channel_in), jnp.float32)
    # epsilon drawn on host side (deterministic / checkable); shapes in the
    # transposed (in, out) layout used by the kernel.
    eps_w = jax.random.normal(k_ew, (channel_in, channel_out), jnp.float32)
    eps_b = jax.random.normal(k_eb, (1, channel_out), jnp.float32)

    fwd = jax.jit(bayesian_layer_forward,
                  static_argnames=("sample", "batch_tile", "use_bf16_matmul"))

    out, lp, lq = jax.block_until_ready(fwd(x, params, eps_w, eps_b))

    ref_out, ref_lp, ref_lq = reference_forward(x, params, eps_w, eps_b)
    assert out.shape == (batch, channel_out)
    assert bool(jnp.allclose(out, ref_out, atol=1e-4, rtol=1e-4)), "output mismatch"
    assert bool(jnp.allclose(lp, ref_lp, atol=1e-2, rtol=1e-4)), "log_prior mismatch"
    assert bool(jnp.allclose(lq, ref_lq, atol=1e-2, rtol=1e-4)), "log_posterior mismatch"

    # mixed-precision MXU path (perf option for v6e/v7x); looser tolerance vs f32 ref
    out_bf16, _, _ = fwd(x, params, eps_w, eps_b, use_bf16_matmul=True)
    out_bf16 = jax.block_until_ready(out_bf16)
    assert bool(jnp.allclose(out_bf16, ref_out, atol=5e-2, rtol=5e-2)), "bf16 output mismatch"

    print("KERNEL_OK")
</pallas_src>

<mosaic_0001>
module attributes {stable_mosaic.version = 11 : i64} {
  func.func @sample_stats_kernel(%arg0: i32, %arg1: memref<32x64xf32, #tpu.memory_space<vmem>>, %arg2: memref<32x64xf32, #tpu.memory_space<vmem>>, %arg3: memref<32x64xf32, #tpu.memory_space<vmem>>, %arg4: memref<1x64xf32, #tpu.memory_space<vmem>>, %arg5: memref<1x64xf32, #tpu.memory_space<vmem>>, %arg6: memref<1x64xf32, #tpu.memory_space<vmem>>, %arg7: memref<32x64xf32, #tpu.memory_space<vmem>>, %arg8: memref<1x64xf32, #tpu.memory_space<vmem>>, %arg9: memref<1x1xf32, #tpu.memory_space<vmem>>, %arg10: memref<1x1xf32, #tpu.memory_space<vmem>>) attributes {dimension_semantics = [#tpu.dimension_semantics<arbitrary>], iteration_bounds = array<i64: 1>, scalar_prefetch = 0 : i64, scratch_operands = 0 : i64, tpu.core_type = #tpu.core_type<tc>, window_params = [{pipeline_mode = #tpu.pipeline_mode<synchronous>, transform_indices = @transform_0, window_bounds = array<i64: 32, 64>}, {pipeline_mode = #tpu.pipeline_mode<synchronous>, transform_indices = @transform_1, window_bounds = array<i64: 32, 64>}, {pipeline_mode = #tpu.pipeline_mode<synchronous>, transform_indices = @transform_2, window_bounds = array<i64: 32, 64>}, {pipeline_mode = #tpu.pipeline_mode<synchronous>, transform_indices = @transform_3, window_bounds = array<i64: 1, 64>}, {pipeline_mode = #tpu.pipeline_mode<synchronous>, transform_indices = @transform_4, window_bounds = array<i64: 1, 64>}, {pipeline_mode = #tpu.pipeline_mode<synchronous>, transform_indices = @transform_5, window_bounds = array<i64: 1, 64>}, {pipeline_mode = #tpu.pipeline_mode<synchronous>, transform_indices = @transform_6, window_bounds = array<i64: 32, 64>}, {pipeline_mode = #tpu.pipeline_mode<synchronous>, transform_indices = @transform_7, window_bounds = array<i64: 1, 64>}, {pipeline_mode = #tpu.pipeline_mode<synchronous>, transform_indices = @transform_8, window_bounds = array<i64: 1, 1>}, {pipeline_mode = #tpu.pipeline_mode<synchronous>, transform_indices = @transform_9, window_bounds = array<i64: 1, 1>}]} {
    %c0 = arith.constant 0 : index
    %c0_0 = arith.constant 0 : index
    %0 = vector.load %arg1[%c0, %c0_0] : memref<32x64xf32, #tpu.memory_space<vmem>>, vector<32x64xf32>
    %c0_1 = arith.constant 0 : index
    %c0_2 = arith.constant 0 : index
    %1 = vector.load %arg2[%c0_1, %c0_2] : memref<32x64xf32, #tpu.memory_space<vmem>>, vector<32x64xf32>
    %c0_3 = arith.constant 0 : index
    %c0_4 = arith.constant 0 : index
    %2 = vector.load %arg3[%c0_3, %c0_4] : memref<32x64xf32, #tpu.memory_space<vmem>>, vector<32x64xf32>
    %c0_5 = arith.constant 0 : index
    %c0_6 = arith.constant 0 : index
    %3 = vector.load %arg4[%c0_5, %c0_6] : memref<1x64xf32, #tpu.memory_space<vmem>>, vector<1x64xf32>
    %c0_7 = arith.constant 0 : index
    %c0_8 = arith.constant 0 : index
    %4 = vector.load %arg5[%c0_7, %c0_8] : memref<1x64xf32, #tpu.memory_space<vmem>>, vector<1x64xf32>
    %c0_9 = arith.constant 0 : index
    %c0_10 = arith.constant 0 : index
    %5 = vector.load %arg6[%c0_9, %c0_10] : memref<1x64xf32, #tpu.memory_space<vmem>>, vector<1x64xf32>
    %6 = math.exp %1 : vector<32x64xf32>
    %cst = arith.constant 1.000000e+00 : f32
    %7 = vector.broadcast %cst : f32 to vector<32x64xf32>
    %8 = arith.addf %7, %6 : vector<32x64xf32>
    %9 = math.log %8 : vector<32x64xf32>
    %10 = math.exp %4 : vector<1x64xf32>
    %cst_11 = arith.constant 1.000000e+00 : f32
    %11 = vector.broadcast %cst_11 : f32 to vector<1x64xf32>
    %12 = arith.addf %11, %10 : vector<1x64xf32>
    %13 = math.log %12 : vector<1x64xf32>
    %14 = arith.mulf %9, %2 : vector<32x64xf32>
    %15 = arith.addf %0, %14 : vector<32x64xf32>
    %16 = arith.mulf %13, %5 : vector<1x64xf32>
    %17 = arith.addf %3, %16 : vector<1x64xf32>
    %c0_12 = arith.constant 0 : index
    %c0_13 = arith.constant 0 : index
    %18 = vector.load %arg7[%c0_12, %c0_13] : memref<32x64xf32, #tpu.memory_space<vmem>>, vector<32x64xf32>
    tpu.vector_store %arg7[%c0_12, %c0_13], %15 {strides = array<i32>} : memref<32x64xf32, #tpu.memory_space<vmem>>, vector<32x64xf32>,
    %c0_14 = arith.constant 0 : index
    %c0_15 = arith.constant 0 : index
    %19 = vector.load %arg8[%c0_14, %c0_15] : memref<1x64xf32, #tpu.memory_space<vmem>>, vector<1x64xf32>
    tpu.vector_store %arg8[%c0_14, %c0_15], %17 {strides = array<i32>} : memref<1x64xf32, #tpu.memory_space<vmem>>, vector<1x64xf32>,
    %20 = arith.mulf %15, %15 : vector<32x64xf32>
    %cst_16 = arith.constant 0.000000e+00 : f32
    %21 = vector.broadcast %cst_16 : f32 to vector<32x64xf32>
    %22 = arith.subf %21, %20 : vector<32x64xf32>
    %cst_17 = arith.constant 2.000000e+00 : f32
    %23 = vector.broadcast %cst_17 : f32 to vector<32x64xf32>
    %24 = arith.divf %22, %23 : vector<32x64xf32>
    %25 = math.exp %24 : vector<32x64xf32>
    %cst_18 = arith.constant 0.398942292 : f32
    %26 = vector.broadcast %cst_18 : f32 to vector<32x64xf32>
    %27 = arith.mulf %26, %25 : vector<32x64xf32>
    %28 = arith.mulf %15, %15 : vector<32x64xf32>
    %cst_19 = arith.constant 0.000000e+00 : f32
    %29 = vector.broadcast %cst_19 : f32 to vector<32x64xf32>
    %30 = arith.subf %29, %28 : vector<32x64xf32>
    %cst_20 = arith.constant 6.70925248E-4 : f32
    %31 = vector.broadcast %cst_20 : f32 to vector<32x64xf32>
    %32 = arith.divf %30, %31 : vector<32x64xf32>
    %33 = math.exp %32 : vector<32x64xf32>
    %cst_21 = arith.constant 21.7815113 : f32
    %34 = vector.broadcast %cst_21 : f32 to vector<32x64xf32>
    %35 = arith.mulf %34, %33 : vector<32x64xf32>
    %cst_22 = arith.constant 5.000000e-01 : f32
    %36 = vector.broadcast %cst_22 : f32 to vector<32x64xf32>
    %37 = arith.mulf %36, %27 : vector<32x64xf32>
    %cst_23 = arith.constant 5.000000e-01 : f32
    %38 = vector.broadcast %cst_23 : f32 to vector<32x64xf32>
    %39 = arith.mulf %38, %35 : vector<32x64xf32>
    %40 = arith.addf %37, %39 : vector<32x64xf32>
    %41 = math.log %40 : vector<32x64xf32>
    %cst_24 = arith.constant dense<0.000000e+00> : vector<32xf32>
    %42 = vector.multi_reduction <add>, %41, %cst_24 [1] : vector<32x64xf32> to vector<32xf32>
    %43 = vector.shape_cast %42 : vector<32xf32> to vector<32x1xf32>
    %cst_25 = arith.constant dense<0.000000e+00> : vector<1xf32>
    %44 = vector.multi_reduction <add>, %43, %cst_25 [0] : vector<32x1xf32> to vector<1xf32>
    %45 = vector.shape_cast %44 : vector<1xf32> to vector<1x1xf32>
    %46 = arith.mulf %17, %17 : vector<1x64xf32>
    %cst_26 = arith.constant 0.000000e+00 : f32
    %47 = vector.broadcast %cst_26 : f32 to vector<1x64xf32>
    %48 = arith.subf %47, %46 : vector<1x64xf32>
    %cst_27 = arith.constant 2.000000e+00 : f32
    %49 = vector.broadcast %cst_27 : f32 to vector<1x64xf32>
    %50 = arith.divf %48, %49 : vector<1x64xf32>
    %51 = math.exp %50 : vector<1x64xf32>
    %cst_28 = arith.constant 0.398942292 : f32
    %52 = vector.broadcast %cst_28 : f32 to vector<1x64xf32>
    %53 = arith.mulf %52, %51 : vector<1x64xf32>
    %54 = arith.mulf %17, %17 : vector<1x64xf32>
    %cst_29 = arith.constant 0.000000e+00 : f32
    %55 = vector.broadcast %cst_29 : f32 to vector<1x64xf32>
    %56 = arith.subf %55, %54 : vector<1x64xf32>
    %cst_30 = arith.constant 1.22884248E-5 : f32
    %57 = vector.broadcast %cst_30 : f32 to vector<1x64xf32>
    %58 = arith.divf %56, %57 : vector<1x64xf32>
    %59 = math.exp %58 : vector<1x64xf32>
    %cst_31 = arith.constant 160.944809 : f32
    %60 = vector.broadcast %cst_31 : f32 to vector<1x64xf32>
    %61 = arith.mulf %60, %59 : vector<1x64xf32>
    %cst_32 = arith.constant 5.000000e-01 : f32
    %62 = vector.broadcast %cst_32 : f32 to vector<1x64xf32>
    %63 = arith.mulf %62, %53 : vector<1x64xf32>
    %cst_33 = arith.constant 5.000000e-01 : f32
    %64 = vector.broadcast %cst_33 : f32 to vector<1x64xf32>
    %65 = arith.mulf %64, %61 : vector<1x64xf32>
    %66 = arith.addf %63, %65 : vector<1x64xf32>
    %67 = math.log %66 : vector<1x64xf32>
    %cst_34 = arith.constant dense<0.000000e+00> : vector<1xf32>
    %68 = vector.multi_reduction <add>, %67, %cst_34 [1] : vector<1x64xf32> to vector<1xf32>
    %69 = vector.shape_cast %68 : vector<1xf32> to vector<1x1xf32>
    %cst_35 = arith.constant dense<0.000000e+00> : vector<1xf32>
    %70 = vector.multi_reduction <add>, %69, %cst_35 [0] : vector<1x1xf32> to vector<1xf32>
    %71 = vector.shape_cast %70 : vector<1xf32> to vector<1x1xf32>
    %72 = arith.addf %45, %71 : vector<1x1xf32>
    %c0_36 = arith.constant 0 : index
    %c0_37 = arith.constant 0 : index
    %73 = vector.load %arg9[%c0_36, %c0_37] : memref<1x1xf32, #tpu.memory_space<vmem>>, vector<1x1xf32>
    tpu.vector_store %arg9[%c0_36, %c0_37], %72 {strides = array<i32>} : memref<1x1xf32, #tpu.memory_space<vmem>>, vector<1x1xf32>,
    %74 = math.log %9 : vector<32x64xf32>
    %cst_38 = arith.constant -0.918938517 : f32
    %75 = vector.broadcast %cst_38 : f32 to vector<32x64xf32>
    %76 = arith.subf %75, %74 : vector<32x64xf32>
    %77 = arith.subf %15, %0 : vector<32x64xf32>
    %78 = arith.mulf %77, %77 : vector<32x64xf32>
    %cst_39 = arith.constant 2.000000e+00 : f32
    %79 = vector.broadcast %cst_39 : f32 to vector<32x64xf32>
    %80 = arith.mulf %79, %9 : vector<32x64xf32>
    %81 = arith.mulf %80, %9 : vector<32x64xf32>
    %82 = arith.divf %78, %81 : vector<32x64xf32>
    %83 = arith.subf %76, %82 : vector<32x64xf32>
    %cst_40 = arith.constant dense<0.000000e+00> : vector<32xf32>
    %84 = vector.multi_reduction <add>, %83, %cst_40 [1] : vector<32x64xf32> to vector<32xf32>
    %85 = vector.shape_cast %84 : vector<32xf32> to vector<32x1xf32>
    %cst_41 = arith.constant dense<0.000000e+00> : vector<1xf32>
    %86 = vector.multi_reduction <add>, %85, %cst_41 [0] : vector<32x1xf32> to vector<1xf32>
    %87 = vector.shape_cast %86 : vector<1xf32> to vector<1x1xf32>
    %88 = math.log %13 : vector<1x64xf32>
    %cst_42 = arith.constant -0.918938517 : f32
    %89 = vector.broadcast %cst_42 : f32 to vector<1x64xf32>
    %90 = arith.subf %89, %88 : vector<1x64xf32>
    %91 = arith.subf %17, %3 : vector<1x64xf32>
    %92 = arith.mulf %91, %91 : vector<1x64xf32>
    %cst_43 = arith.constant 2.000000e+00 : f32
    %93 = vector.broadcast %cst_43 : f32 to vector<1x64xf32>
    %94 = arith.mulf %93, %13 : vector<1x64xf32>
    %95 = arith.mulf %94, %13 : vector<1x64xf32>
    %96 = arith.divf %92, %95 : vector<1x64xf32>
    %97 = arith.subf %90, %96 : vector<1x64xf32>
    %cst_44 = arith.constant dense<0.000000e+00> : vector<1xf32>
    %98 = vector.multi_reduction <add>, %97, %cst_44 [1] : vector<1x64xf32> to vector<1xf32>
    %99 = vector.shape_cast %98 : vector<1xf32> to vector<1x1xf32>
    %cst_45 = arith.constant dense<0.000000e+00> : vector<1xf32>
    %100 = vector.multi_reduction <add>, %99, %cst_45 [0] : vector<1x1xf32> to vector<1xf32>
    %101 = vector.shape_cast %100 : vector<1xf32> to vector<1x1xf32>
    %102 = arith.addf %87, %101 : vector<1x1xf32>
    %c0_46 = arith.constant 0 : index
    %c0_47 = arith.constant 0 : index
    %103 = vector.load %arg10[%c0_46, %c0_47] : memref<1x1xf32, #tpu.memory_space<vmem>>, vector<1x1xf32>
    tpu.vector_store %arg10[%c0_46, %c0_47], %102 {strides = array<i32>} : memref<1x1xf32, #tpu.memory_space<vmem>>, vector<1x1xf32>,
    return
  }
  func.func @transform_0(%arg0: i32) -> (i32, i32) {
    %c0_i32 = arith.constant 0 : i32
    %c0_i32_0 = arith.constant 0 : i32
    %c0_i32_1 = arith.constant 0 : i32
    return %c0_i32, %c0_i32_0 : i32, i32
  }
  func.func @transform_1(%arg0: i32) -> (i32, i32) {
    %c0_i32 = arith.constant 0 : i32
    %c0_i32_0 = arith.constant 0 : i32
    %c0_i32_1 = arith.constant 0 : i32
    return %c0_i32, %c0_i32_0 : i32, i32
  }
  func.func @transform_2(%arg0: i32) -> (i32, i32) {
    %c0_i32 = arith.constant 0 : i32
    %c0_i32_0 = arith.constant 0 : i32
    %c0_i32_1 = arith.constant 0 : i32
    return %c0_i32, %c0_i32_0 : i32, i32
  }
  func.func @transform_3(%arg0: i32) -> (i32, i32) {
    %c0_i32 = arith.constant 0 : i32
    %c0_i32_0 = arith.constant 0 : i32
    %c0_i32_1 = arith.constant 0 : i32
    return %c0_i32, %c0_i32_0 : i32, i32
  }
  func.func @transform_4(%arg0: i32) -> (i32, i32) {
    %c0_i32 = arith.constant 0 : i32
    %c0_i32_0 = arith.constant 0 : i32
    %c0_i32_1 = arith.constant 0 : i32
    return %c0_i32, %c0_i32_0 : i32, i32
  }
  func.func @transform_5(%arg0: i32) -> (i32, i32) {
    %c0_i32 = arith.constant 0 : i32
    %c0_i32_0 = arith.constant 0 : i32
    %c0_i32_1 = arith.constant 0 : i32
    return %c0_i32, %c0_i32_0 : i32, i32
  }
  func.func @transform_6(%arg0: i32) -> (i32, i32) {
    %c0_i32 = arith.constant 0 : i32
    %c0_i32_0 = arith.constant 0 : i32
    %c0_i32_1 = arith.constant 0 : i32
    return %c0_i32, %c0_i32_0 : i32, i32
  }
  func.func @transform_7(%arg0: i32) -> (i32, i32) {
    %c0_i32 = arith.constant 0 : i32
    %c0_i32_0 = arith.constant 0 : i32
    %c0_i32_1 = arith.constant 0 : i32
    return %c0_i32, %c0_i32_0 : i32, i32
  }
  func.func @transform_8(%arg0: i32) -> (i32, i32) {
    %c0_i32 = arith.constant 0 : i32
    %c0_i32_0 = arith.constant 0 : i32
    %c0_i32_1 = arith.constant 0 : i32
    return %c0_i32, %c0_i32_0 : i32, i32
  }
  func.func @transform_9(%arg0: i32) -> (i32, i32) {
    %c0_i32 = arith.constant 0 : i32
    %c0_i32_0 = arith.constant 0 : i32
    %c0_i32_1 = arith.constant 0 : i32
    return %c0_i32, %c0_i32_0 : i32, i32
  }
}

module attributes {stable_mosaic.version = 11 : i64} {
  func.func @linear_kernel(%arg0: i32, %arg1: memref<16x128xf32, #tpu.memory_space<vmem>>, %arg2: memref<128x128xf32, #tpu.memory_space<vmem>>, %arg3: memref<1x128xf32, #tpu.memory_space<vmem>>, %arg4: memref<16x128xf32, #tpu.memory_space<vmem>>) attributes {dimension_semantics = [#tpu.dimension_semantics<parallel>], iteration_bounds = array<i64: 1>, scalar_prefetch = 0 : i64, scratch_operands = 0 : i64, tpu.core_type = #tpu.core_type<tc>, window_params = [{transform_indices = @transform_0, window_bounds = array<i64: 16, 128>}, {pipeline_mode = #tpu.pipeline_mode<synchronous>, transform_indices = @transform_1, window_bounds = array<i64: 128, 128>}, {pipeline_mode = #tpu.pipeline_mode<synchronous>, transform_indices = @transform_2, window_bounds = array<i64: 1, 128>}, {transform_indices = @transform_3, window_bounds = array<i64: 16, 128>}]} {
    %c0 = arith.constant 0 : index
    %c0_0 = arith.constant 0 : index
    %0 = vector.load %arg1[%c0, %c0_0] : memref<16x128xf32, #tpu.memory_space<vmem>>, vector<16x128xf32>
    %c0_1 = arith.constant 0 : index
    %c0_2 = arith.constant 0 : index
    %1 = vector.load %arg2[%c0_1, %c0_2] : memref<128x128xf32, #tpu.memory_space<vmem>>, vector<128x128xf32>
    %cst = arith.constant dense<0.000000e+00> : vector<16x128xf32>
    %2 = tpu.matmul %0, %1, %cst {dimension_numbers = #tpu.dot_dimension_numbers<[1], [0], [0], [1], [0, 0, 1, 1], [], []>} : vector<16x128xf32>, vector<128x128xf32>, vector<16x128xf32> -> vector<16x128xf32>
    %c0_3 = arith.constant 0 : index
    %c0_4 = arith.constant 0 : index
    %3 = vector.load %arg3[%c0_3, %c0_4] : memref<1x128xf32, #tpu.memory_space<vmem>>, vector<1x128xf32>
    %4 = vector.broadcast %3 : vector<1x128xf32> to vector<16x128xf32>
    %5 = arith.addf %2, %4 : vector<16x128xf32>
    %c0_5 = arith.constant 0 : index
    %c0_6 = arith.constant 0 : index
    %6 = vector.load %arg4[%c0_5, %c0_6] : memref<16x128xf32, #tpu.memory_space<vmem>>, vector<16x128xf32>
    tpu.vector_store %arg4[%c0_5, %c0_6], %5 {strides = array<i32>} : memref<16x128xf32, #tpu.memory_space<vmem>>, vector<16x128xf32>,
    return
  }
  func.func @transform_0(%arg0: i32) -> (i32, i32) {
    %c0_i32 = arith.constant 0 : i32
    %c0_i32_0 = arith.constant 0 : i32
    return %arg0, %c0_i32 : i32, i32
  }
  func.func @transform_1(%arg0: i32) -> (i32, i32) {
    %c0_i32 = arith.constant 0 : i32
    %c0_i32_0 = arith.constant 0 : i32
    %c0_i32_1 = arith.constant 0 : i32
    return %c0_i32, %c0_i32_0 : i32, i32
  }
  func.func @transform_2(%arg0: i32) -> (i32, i32) {
    %c0_i32 = arith.constant 0 : i32
    %c0_i32_0 = arith.constant 0 : i32
    %c0_i32_1 = arith.constant 0 : i32
    return %c0_i32, %c0_i32_0 : i32, i32
  }
  func.func @transform_3(%arg0: i32) -> (i32, i32) {
    %c0_i32 = arith.constant 0 : i32
    %c0_i32_0 = arith.constant 0 : i32
    return %arg0, %c0_i32 : i32, i32
  }
}

</mosaic_0001>

<llo_original>
// kernel: bayesian_layer_forward.3
$region0: #{bayesian_layer_forward.3}
  #allocation0 [shape = 'u32[]', space=smem, size = 0x4, offset = 0x4, fixed_abs, tag = 'smem constant byte address 0x4 - core index']
  #allocation1 [shape = 'u32[144,128]{1,0:T(1,128)}', space=vmem, size = 0x12000, scoped, tag = 'internal scratch']
  %s0 = inlined_call_operand.vmem [shape: f32[16,128], index: 0, kind: input, shape index: {}]
  %s1 = inlined_call_operand.vmem [shape: f32[128,128], index: 1, kind: input, shape index: {}]
  %s2 = inlined_call_operand.vmem [shape: f32[1,128], index: 2, kind: input, shape index: {}]
  %s3 = inlined_call_operand.hbm [shape: f32[16,128], index: 3, kind: output, shape index: {}]
  %s4 = sld [smem:[#allocation0]]
  $region22: #{bayesian_layer_forward.3} parent=0
    _
  %s6 = ssub.s32 1, %s4
  %s7 = scalar_select 0, %s6, %s4
  $region1: #{bayesian_layer_forward.3} parent=0
    #allocation2 [shape = 'u8[8192]{0}', space=vmem, size = 0x2000, scoped, tag = 'output window, operand 0, single buffered']
    #allocation3 [shape = 's32[1]{0}', space=sflag, size = 0x4, scoped, tag = 'scoped memory for bayesian_layer_forward.3']
    %8 = vsyncpa [#allocation3], 0
    // Predicated region
    $region2: #{bayesian_layer_forward.3} parent=1 // pred_check
      _
    $region3: #{bayesian_layer_forward.3} parent=1 // pred_check_branch
      %10 = sbr.rel (0) target = $region5
    $region4: #{bayesian_layer_forward.3} parent=1 // pred_region
      _
    $region5: #{bayesian_layer_forward.3} parent=1 // pred_fallthru
      _
    // Predicated region
    $region6: #{bayesian_layer_forward.3} parent=1 // pred_check
      _
    $region7: #{bayesian_layer_forward.3} parent=1 // pred_check_branch
      %12 = sbr.rel (0) target = $region9
    $region8: #{bayesian_layer_forward.3} parent=1 // pred_region
      _
    $region9: #{bayesian_layer_forward.3} parent=1 // pred_fallthru
      _
    // Predicated region
    $region10: #{bayesian_layer_forward.3} parent=1 // pred_check
      _
    $region11: #{bayesian_layer_forward.3} parent=1 // pred_check_branch
      %14 = sbr.rel (0) target = $region13
    $region12: #{bayesian_layer_forward.3} parent=1 // pred_region
      _
    $region13: #{bayesian_layer_forward.3} parent=1 // pred_fallthru
      _
    %v15 = vld [vmem:[%s0] sm:$0xff]
    %v16 = vld [vmem:[%s0 + $0x8] sm:$0xff]
    %v17 = vld [vmem:[%s1] sm:$0xff]
    %v18 = vld [vmem:[%s1 + $0x8] sm:$0xff]
    %v19 = vld [vmem:[%s1 + $0x10] sm:$0xff]
    %v20 = vld [vmem:[%s1 + $0x18] sm:$0xff]
    %v21 = vld [vmem:[%s1 + $0x20] sm:$0xff]
    %v22 = vld [vmem:[%s1 + $0x28] sm:$0xff]
    %v23 = vld [vmem:[%s1 + $0x30] sm:$0xff]
    %v24 = vld [vmem:[%s1 + $0x38] sm:$0xff]
    %v25 = vld [vmem:[%s1 + $0x40] sm:$0xff]
    %v26 = vld [vmem:[%s1 + $0x48] sm:$0xff]
    %v27 = vld [vmem:[%s1 + $0x50] sm:$0xff]
    %v28 = vld [vmem:[%s1 + $0x58] sm:$0xff]
    %v29 = vld [vmem:[%s1 + $0x60] sm:$0xff]
    %v30 = vld [vmem:[%s1 + $0x68] sm:$0xff]
    %v31 = vld [vmem:[%s1 + $0x70] sm:$0xff]
    %v32 = vld [vmem:[%s1 + $0x78] sm:$0xff]
    %v33 = vld [vmem:[%s2] sm:$0x1]
    %v35 = vlaneseq
    %v36 = vshrl.u32 %v35, 7
    %v37 = vsub.s32 0, %v36
    %v38 = vrot.slane %v33, %v37
    %40 = vmatprep.subr.mxu0 0.0
    %41 = vmatpush1.msra.mxu0 %v17
    %42 = vmatprep.subr.mxu0 0.0
    %43 = vmatpush1.msra.mxu0 %v18
    %44 = vmatprep.subr.mxu0 0.0
    %45 = vmatpush1.msra.mxu0 %v19
    %46 = vmatprep.subr.mxu0 0.0
    %47 = vmatpush1.msra.mxu0 %v20
    %48 = vmatprep.subr.mxu0 0.0
    %49 = vmatpush1.msra.mxu0 %v21
    %50 = vmatprep.subr.mxu0 0.0
    %51 = vmatpush1.msra.mxu0 %v22
    %52 = vmatprep.subr.mxu0 0.0
    %53 = vmatpush1.msra.mxu0 %v23
    %54 = vmatprep.subr.mxu0 0.0
    %55 = vmatpush1.msra.mxu0 %v24
    %56 = vmatprep.subr.mxu0 0.0
    %57 = vmatpush1.msra.mxu0 %v25
    %58 = vmatprep.subr.mxu0 0.0
    %59 = vmatpush1.msra.mxu0 %v26
    %60 = vmatprep.subr.mxu0 0.0
    %61 = vmatpush1.msra.mxu0 %v27
    %62 = vmatprep.subr.mxu0 0.0
    %63 = vmatpush1.msra.mxu0 %v28
    %64 = vmatprep.subr.mxu0 0.0
    %65 = vmatpush1.msra.mxu0 %v29
    %66 = vmatprep.subr.mxu0 0.0
    %67 = vmatpush1.msra.mxu0 %v30
    %68 = vmatprep.subr.mxu0 0.0
    %69 = vmatpush1.msra.mxu0 %v31
    %70 = vmatprep.subr.mxu0 0.0
    %71 = vmatpush1.msra.mxu0 %v32
    %72 = vmatprep.subr.mxu0 0.0
    %73 = vmatpush1.msra.mxu0 0.0
    %74 = vmatprep.subr.mxu0 0.0
    %75 = vmatpush1.msra.mxu0 0.0
    %76 = vmatprep.subr.mxu0 0.0
    %77 = vmatpush1.msra.mxu0 0.0
    %78 = vmatprep.subr.mxu0 0.0
    %79 = vmatpush1.msra.mxu0 0.0
    %80 = vmatprep.subr.mxu0 0.0
    %81 = vmatpush1.msra.mxu0 0.0
    %82 = vmatprep.subr.mxu0 0.0
    %83 = vmatpush1.msra.mxu0 0.0
    %84 = vmatprep.subr.mxu0 0.0
    %85 = vmatpush1.msra.mxu0 0.0
    %86 = vmatprep.subr.mxu0 0.0
    %87 = vmatpush1.msra.mxu0 0.0
    %88 = vmatprep.subr.mxu0 0.0
    %89 = vmatpush1.msra.mxu0 0.0
    %90 = vmatprep.subr.mxu0 0.0
    %91 = vmatpush1.msra.mxu0 0.0
    %92 = vmatprep.subr.mxu0 0.0
    %93 = vmatpush1.msra.mxu0 0.0
    %94 = vmatprep.subr.mxu0 0.0
    %95 = vmatpush1.msra.mxu0 0.0
    %96 = vmatprep.subr.mxu0 0.0
    %97 = vmatpush1.msra.mxu0 0.0
    %98 = vmatprep.subr.mxu0 0.0
    %99 = vmatpush1.msra.mxu0 0.0
    %100 = vmatprep.subr.mxu0 0.0
    %101 = vmatpush1.msra.mxu0 0.0
    %102 = vmatprep.subr.mxu0 0.0
    %103 = vmatpush1.msra.mxu0 0.0
    %104 = vmatprep.mubr.f32.mxu0 0.0
    %105 = vmatmul.mubr.f32.gmra.mrb[0].mxu0 %v15
    %v106 = vpop.f32.mrb[0].mxu0
    %v107 = vadd.f32 %v38, %v106
    %v108 = vpop.f32.mrb[0].mxu0
    %109 = vmatprep.mubr.f32.mxu0 0.0
    %110 = vmatmul.mubr.f32.gmra.mrb[0].mxu0 %v16
    %v111 = vpop.f32.mrb[0].mxu0
    %v112 = vadd.f32 %v38, %v111
    %v113 = vpop.f32.mrb[0].mxu0
    %114 = vdwg.mxu0
    %115 = vst [vmem:[#allocation2] sm:$0xff] %v107
    %116 = vst [vmem:[#allocation2 + $0x8] sm:$0xff] %v112
    // Predicated region
    $region14: #{bayesian_layer_forward.3} parent=1 // pred_check
      _
    $region15: #{bayesian_layer_forward.3} parent=1 // pred_check_branch
      %118 = sbr.rel (0) target = $region17
    $region16: #{bayesian_layer_forward.3} parent=1 // pred_region
      %s120 = ssub.s32 256, 256
      %121 = vsyncadd [#allocation3], %s120
      %s122 = sshll.u32 [#allocation2], 4
      %s123 = int_to_ptr.vmem [resolvable:$true] %s122
      %128 = dma.vmem_to_hbm [thread:$0]  %s123, 256, %s3, [#allocation3], 128, 128, 8
    $region17: #{bayesian_layer_forward.3} parent=1 // pred_fallthru
      _
    // Predicated region
    $region18: #{bayesian_layer_forward.3} parent=1 // pred_check
      _
    $region19: #{bayesian_layer_forward.3} parent=1 // pred_check_branch
      %130 = sbr.rel (0) target = $region21
    $region20: #{bayesian_layer_forward.3} parent=1 // pred_region
      %131 = dma.done [#allocation3], 256
    $region21: #{bayesian_layer_forward.3} parent=1 // pred_fallthru
      _
    %132 = vsyncpa [#allocation3], 1

// kernel: bayesian_layer_forward.2
$region0: #{bayesian_layer_forward.2}
  #allocation0 [shape = 'u32[]', space=smem, size = 0x4, offset = 0x4, fixed_abs, tag = 'smem constant byte address 0x4 - core index']
  #allocation1 [shape = 'u32[144,128]{1,0:T(1,128)}', space=vmem, size = 0x12000, scoped, tag = 'internal scratch']
  %s0 = inlined_call_operand.vmem [shape: f32[32,64], index: 0, kind: input, shape index: {}]
  %s1 = inlined_call_operand.hbm [shape: f32[32,64], index: 1, kind: input, shape index: {}]
  %s2 = inlined_call_operand.hbm [shape: f32[32,64], index: 2, kind: input, shape index: {}]
  %s3 = inlined_call_operand.vmem [shape: f32[1,64], index: 3, kind: input, shape index: {}]
  %s4 = inlined_call_operand.vmem [shape: f32[1,64], index: 4, kind: input, shape index: {}]
  %s5 = inlined_call_operand.vmem [shape: f32[1,64], index: 5, kind: input, shape index: {}]
  %s6 = inlined_call_operand.vmem [shape: f32[32,64], index: 6, kind: output, shape index: {0}]
  %s7 = inlined_call_operand.vmem [shape: f32[1,64], index: 7, kind: output, shape index: {1}]
  %s8 = inlined_call_operand.hbm [shape: f32[1,1], index: 8, kind: output, shape index: {2}]
  %s9 = inlined_call_operand.hbm [shape: f32[1,1], index: 9, kind: output, shape index: {3}]
  %10 = xla_tuple %s6, %s7, %s8, %s9
  %s11 = sld [smem:[#allocation0]]
  $region66: #{bayesian_layer_forward.2} parent=0
    _
  %s13 = ssub.s32 1, %s11
  %s14 = scalar_select 0, %s13, %s11
  $region1: #{bayesian_layer_forward.2} parent=0
    #allocation2 [shape = 'u8[16384]{0}', space=vmem, size = 0x4000, scoped, tag = 'input window, operand 1, single buffered']
    #allocation3 [shape = 's32[1]{0}', space=sflag, size = 0x4, scoped, tag = 'scoped memory for bayesian_layer_forward.2']
    #allocation4 [shape = 's32[1]{0}', space=sflag, size = 0x4, scoped, tag = 'scoped memory for bayesian_layer_forward.2']
    #allocation5 [shape = 'u8[16384]{0}', space=vmem, size = 0x4000, scoped, tag = 'input window, operand 2, single buffered']
    #allocation6 [shape = 's32[1]{0}', space=sflag, size = 0x4, scoped, tag = 'scoped memory for bayesian_layer_forward.2']
    #allocation7 [shape = 'u8[512]{0}', space=vmem, size = 0x400, scoped, tag = 'output window, operand 2, single buffered']
    #allocation8 [shape = 'u8[512]{0}', space=vmem, size = 0x400, scoped, tag = 'output window, operand 3, single buffered']
    #allocation9 [shape = 's32[1]{0}', space=sflag, size = 0x4, scoped, tag = 'scoped memory for bayesian_layer_forward.2']
    %15 = vsyncpa [#allocation3], 0
    %16 = vsyncpa [#allocation6], 0
    %17 = vsyncpa [#allocation4], 0
    %18 = vsyncpa [#allocation9], 0
    // Predicated region
    $region2: #{bayesian_layer_forward.2} parent=1 // pred_check
      _
    $region3: #{bayesian_layer_forward.2} parent=1 // pred_check_branch
      %20 = sbr.rel (0) target = $region5
    $region4: #{bayesian_layer_forward.2} parent=1 // pred_region
      _
    $region5: #{bayesian_layer_forward.2} parent=1 // pred_fallthru
      _
    // Predicated region
    $region6: #{bayesian_layer_forward.2} parent=1 // pred_check
      _
    $region7: #{bayesian_layer_forward.2} parent=1 // pred_check_branch
      %22 = sbr.rel (0) target = $region9
    $region8: #{bayesian_layer_forward.2} parent=1 // pred_region
      %s24 = ssub.s32 512, 512
      %25 = vsyncadd [#allocation3], %s24
      %s26 = sshll.u32 [#allocation2], 4
      %s27 = int_to_ptr.vmem [resolvable:$true] %s26
      %32 = dma.hbm_to_vmem [thread:$0]  %s1, 512, %s27, [#allocation3], 128, 128, 8
    $region9: #{bayesian_layer_forward.2} parent=1 // pred_fallthru
      _
    // Predicated region
    $region10: #{bayesian_layer_forward.2} parent=1 // pred_check
      _
    $region11: #{bayesian_layer_forward.2} parent=1 // pred_check_branch
      %34 = sbr.rel (0) target = $region13
    $region12: #{bayesian_layer_forward.2} parent=1 // pred_region
      %s36 = ssub.s32 512, 512
      %37 = vsyncadd [#allocation6], %s36
      %s38 = sshll.u32 [#allocation5], 4
      %s39 = int_to_ptr.vmem [resolvable:$true] %s38
      %44 = dma.hbm_to_vmem [thread:$0]  %s2, 512, %s39, [#allocation6], 128, 128, 8
    $region13: #{bayesian_layer_forward.2} parent=1 // pred_fallthru
      _
    // Predicated region
    $region14: #{bayesian_layer_forward.2} parent=1 // pred_check
      _
    $region15: #{bayesian_layer_forward.2} parent=1 // pred_check_branch
      %46 = sbr.rel (0) target = $region17
    $region16: #{bayesian_layer_forward.2} parent=1 // pred_region
      _
    $region17: #{bayesian_layer_forward.2} parent=1 // pred_fallthru
      _
    // Predicated region
    $region18: #{bayesian_layer_forward.2} parent=1 // pred_check
      _
    $region19: #{bayesian_layer_forward.2} parent=1 // pred_check_branch
      %48 = sbr.rel (0) target = $region21
    $region20: #{bayesian_layer_forward.2} parent=1 // pred_region
      _
    $region21: #{bayesian_layer_forward.2} parent=1 // pred_fallthru
      _
    // Predicated region
    $region22: #{bayesian_layer_forward.2} parent=1 // pred_check
      _
    $region23: #{bayesian_layer_forward.2} parent=1 // pred_check_branch
      %50 = sbr.rel (0) target = $region25
    $region24: #{bayesian_layer_forward.2} parent=1 // pred_region
      _
    $region25: #{bayesian_layer_forward.2} parent=1 // pred_fallthru
      _
    // Predicated region
    $region26: #{bayesian_layer_forward.2} parent=1 // pred_check
      _
    $region27: #{bayesian_layer_forward.2} parent=1 // pred_check_branch
      %52 = sbr.rel (0) target = $region29
    $region28: #{bayesian_layer_forward.2} parent=1 // pred_region
      %53 = dma.done [#allocation3], 512
    $region29: #{bayesian_layer_forward.2} parent=1 // pred_fallthru
      _
    // Predicated region
    $region30: #{bayesian_layer_forward.2} parent=1 // pred_check
      _
    $region31: #{bayesian_layer_forward.2} parent=1 // pred_check_branch
      %55 = sbr.rel (0) target = $region33
    $region32: #{bayesian_layer_forward.2} parent=1 // pred_region
      %56 = dma.done [#allocation6], 512
    $region33: #{bayesian_layer_forward.2} parent=1 // pred_fallthru
      _
    %v57 = vld [vmem:[%s0] sm:$0xff]
    %v58 = vld [vmem:[%s0 + $0x8] sm:$0xff]
    %v59 = vld [vmem:[%s0 + $0x10] sm:$0xff]
    %v60 = vld [vmem:[%s0 + $0x18] sm:$0xff]
    %v61 = vld [vmem:[#allocation2] sm:$0xff]
    %v62 = vld [vmem:[#allocation2 + $0x8] sm:$0xff]
    %v63 = vld [vmem:[#allocation2 + $0x10] sm:$0xff]
    %v64 = vld [vmem:[#allocation2 + $0x18] sm:$0xff]
    %v65 = vld [vmem:[#allocation5] sm:$0xff]
    %v66 = vld [vmem:[#allocation5 + $0x8] sm:$0xff]
    %v67 = vld [vmem:[#allocation5 + $0x10] sm:$0xff]
    %v68 = vld [vmem:[#allocation5 + $0x18] sm:$0xff]
    %v69 = vld [vmem:[%s3] sm:$0x1]
    %v70 = vld [vmem:[%s4] sm:$0x1]
    %v71 = vld [vmem:[%s5] sm:$0x1]
    %v72 = vmul.f32 %v61, 1.442695
    %v73 = vpow.pop %v72
    %v74 = vmul.f32 %v62, 1.442695
    %v75 = vpow.pop %v74
    %v76 = vmul.f32 %v63, 1.442695
    %v77 = vpow.pop %v76
    %v78 = vmul.f32 %v64, 1.442695
    %v79 = vpow.pop %v78
    %v80 = vadd.f32 %v73, 1.0
    %v81 = vadd.f32 %v75, 1.0
    %v82 = vadd.f32 %v77, 1.0
    %v83 = vadd.f32 %v79, 1.0
    %v84 = vlog2.pop %v80
    %v85 = vmul.f32 %v84, 0.6931472
    %v86 = vlog2.pop %v81
    %v87 = vmul.f32 %v86, 0.6931472
    %v88 = vlog2.pop %v82
    %v89 = vmul.f32 %v88, 0.6931472
    %v90 = vlog2.pop %v83
    %v91 = vmul.f32 %v90, 0.6931472
    %v92 = vmul.f32 %v70, 1.442695
    %v93 = vpow.pop %v92
    %v94 = vadd.f32 %v93, 1.0
    %v95 = vlog2.pop %v94
    %v96 = vmul.f32 %v95, 0.6931472
    %v97 = vmul.f32 %v85, %v65
    %v98 = vmul.f32 %v87, %v66
    %v99 = vmul.f32 %v89, %v67
    %v100 = vmul.f32 %v91, %v68
    %v101 = vadd.f32 %v57, %v97
    %v102 = vadd.f32 %v58, %v98
    %v103 = vadd.f32 %v59, %v99
    %v104 = vadd.f32 %v60, %v100
    %v105 = vmul.f32 %v96, %v71
    %v106 = vadd.f32 %v69, %v105
    %vm107 = vcmask 523264
    %108 = vst.msk [vmem:[%s6] sm:$0xff] %vm107, %v101
    %109 = vst.msk [vmem:[%s6 + $0x8] sm:$0xff] %vm107, %v102
    %110 = vst.msk [vmem:[%s6 + $0x10] sm:$0xff] %vm107, %v103
    %111 = vst.msk [vmem:[%s6 + $0x18] sm:$0xff] %vm107, %v104
    %vm112 = vcmask 516096
    %113 = vst.msk [vmem:[%s7] sm:$0x1] %vm112, %v106
    %v114 = vmul.f32 %v101, %v101
    %v115 = vmul.f32 %v102, %v102
    %v116 = vmul.f32 %v103, %v103
    %v117 = vmul.f32 %v104, %v104
    %v118 = vsub.f32 0.0, %v114
    %v119 = vsub.f32 0.0, %v115
    %v120 = vsub.f32 0.0, %v116
    %v121 = vsub.f32 0.0, %v117
    %v122 = vrcp.pop 2.0
    %v123 = vmul.f32 %v118, %v122
    %v124 = vmul.f32 %v119, %v122
    %v125 = vmul.f32 %v120, %v122
    %v126 = vmul.f32 %v121, %v122
    %v127 = vmul.f32 %v123, 1.442695
    %v128 = vpow.pop %v127
    %v129 = vmul.f32 %v124, 1.442695
    %v130 = vpow.pop %v129
    %v131 = vmul.f32 %v125, 1.442695
    %v132 = vpow.pop %v131
    %v133 = vmul.f32 %v126, 1.442695
    %v134 = vpow.pop %v133
    %v135 = vmul.f32 %v128, 0.3989423
    %v136 = vmul.f32 %v130, 0.3989423
    %v137 = vmul.f32 %v132, 0.3989423
    %v138 = vmul.f32 %v134, 0.3989423
    %v139 = vrcp.pop 0.00067092525
    %v140 = vmul.f32 %v118, %v139
    %v141 = vmul.f32 %v119, %v139
    %v142 = vmul.f32 %v120, %v139
    %v143 = vmul.f32 %v121, %v139
    %v144 = vmul.f32 %v140, 1.442695
    %v145 = vpow.pop %v144
    %v146 = vmul.f32 %v141, 1.442695
    %v147 = vpow.pop %v146
    %v148 = vmul.f32 %v142, 1.442695
    %v149 = vpow.pop %v148
    %v150 = vmul.f32 %v143, 1.442695
    %v151 = vpow.pop %v150
    %v152 = vmul.f32 %v145, 21.781511
    %v153 = vmul.f32 %v147, 21.781511
    %v154 = vmul.f32 %v149, 21.781511
    %v155 = vmul.f32 %v151, 21.781511
    %v156 = vmul.f32 %v135, 0.5
    %v157 = vmul.f32 %v136, 0.5
    %v158 = vmul.f32 %v137, 0.5
    %v159 = vmul.f32 %v138, 0.5
    %v160 = vmul.f32 %v152, 0.5
    %v161 = vmul.f32 %v153, 0.5
    %v162 = vmul.f32 %v154, 0.5
    %v163 = vmul.f32 %v155, 0.5
    %v164 = vadd.f32 %v156, %v160
    %v165 = vadd.f32 %v157, %v161
    %v166 = vadd.f32 %v158, %v162
    %v167 = vadd.f32 %v159, %v163
    %v168 = vlog2.pop %v164
    %v169 = vmul.f32 %v168, 0.6931472
    %v170 = vlog2.pop %v165
    %v171 = vmul.f32 %v170, 0.6931472
    %v172 = vlog2.pop %v166
    %v173 = vmul.f32 %v172, 0.6931472
    %v174 = vlog2.pop %v167
    %v175 = vmul.f32 %v174, 0.6931472
    %v176 = vsel %vm107, %v169, 0.0
    %177 = vadd.xlane.f32.xlu0 %v176
    %v178 = vpop.xlane.xlu0 %177
    %v179 = vsel %vm107, %v171, 0.0
    %180 = vadd.xlane.f32.xlu0 %v179
    %v181 = vpop.xlane.xlu0 %180
    %v182 = vsel %vm107, %v173, 0.0
    %183 = vadd.xlane.f32.xlu0 %v182
    %v184 = vpop.xlane.xlu0 %183
    %v185 = vsel %vm107, %v175, 0.0
    %186 = vadd.xlane.f32.xlu0 %v185
    %v187 = vpop.xlane.xlu0 %186
    %v188 = vadd.f32 %v178, %v181
    %v189 = vadd.f32 %v188, %v184
    %v190 = vadd.f32 %v189, %v187
    %v191 = vrot.slane %v190, 4
    %v192 = vadd.f32 %v190, %v191
    %v193 = vrot.slane %v192, 2
    %v194 = vadd.f32 %v192, %v193
    %v195 = vrot.slane %v194, 1
    %v196 = vadd.f32 %v194, %v195
    %v197 = vmul.f32 %v106, %v106
    %v198 = vsub.f32 0.0, %v197
    %v199 = vmul.f32 %v198, %v122
    %v200 = vmul.f32 %v199, 1.442695
    %v201 = vpow.pop %v200
    %v202 = vmul.f32 %v201, 0.3989423
    %v203 = vrcp.pop 1.2288425e-05
    %v204 = vmul.f32 %v198, %v203
    %v205 = vmul.f32 %v204, 1.442695
    %v206 = vpow.pop %v205
    %v207 = vmul.f32 %v206, 160.94481
    %v208 = vmul.f32 %v202, 0.5
    %v209 = vmul.f32 %v207, 0.5
    %v210 = vadd.f32 %v208, %v209
    %v211 = vlog2.pop %v210
    %v212 = vmul.f32 %v211, 0.6931472
    %v213 = vsel %vm112, %v212, 0.0
    %214 = vadd.xlane.f32.xlu0 %v213
    %v215 = vpop.xlane.xlu0 %214
    %v216 = vadd.f32 %v215, 0.0
    %v217 = vadd.f32 %v196, %v216
    %vm218 = vcmask 0
    %219 = vst.msk [vmem:[#allocation7] sm:$0x1] %vm218, %v217
    %v220 = vlog2.pop %v85
    %v221 = vmul.f32 %v220, 0.6931472
    %v222 = vlog2.pop %v87
    %v223 = vmul.f32 %v222, 0.6931472
    %v224 = vlog2.pop %v89
    %v225 = vmul.f32 %v224, 0.6931472
    %v226 = vlog2.pop %v91
    %v227 = vmul.f32 %v226, 0.6931472
    %v228 = vsub.f32 -0.9189385, %v221
    %v229 = vsub.f32 -0.9189385, %v223
    %v230 = vsub.f32 -0.9189385, %v225
    %v231 = vsub.f32 -0.9189385, %v227
    %v232 = vsub.f32 %v101, %v57
    %v233 = vsub.f32 %v102, %v58
    %v234 = vsub.f32 %v103, %v59
    %v235 = vsub.f32 %v104, %v60
    %v236 = vmul.f32 %v232, %v232
    %v237 = vmul.f32 %v233, %v233
    %v238 = vmul.f32 %v234, %v234
    %v239 = vmul.f32 %v235, %v235
    %v240 = vmul.f32 %v85, 2.0
    %v241 = vmul.f32 %v87, 2.0
    %v242 = vmul.f32 %v89, 2.0
    %v243 = vmul.f32 %v91, 2.0
    %v244 = vmul.f32 %v240, %v85
    %v245 = vmul.f32 %v241, %v87
    %v246 = vmul.f32 %v242, %v89
    %v247 = vmul.f32 %v243, %v91
    %v248 = vrcp.pop %v244
    %v249 = vmul.f32 %v236, %v248
    %v250 = vrcp.pop %v245
    %v251 = vmul.f32 %v237, %v250
    %v252 = vrcp.pop %v246
    %v253 = vmul.f32 %v238, %v252
    %v254 = vrcp.pop %v247
    %v255 = vmul.f32 %v239, %v254
    %v256 = vsub.f32 %v228, %v249
    %v257 = vsub.f32 %v229, %v251
    %v258 = vsub.f32 %v230, %v253
    %v259 = vsub.f32 %v231, %v255
    %v260 = vsel %vm107, %v256, 0.0
    %261 = vadd.xlane.f32.xlu0 %v260
    %v262 = vpop.xlane.xlu0 %261
    %v263 = vsel %vm107, %v257, 0.0
    %264 = vadd.xlane.f32.xlu0 %v263
    %v265 = vpop.xlane.xlu0 %264
    %v266 = vsel %vm107, %v258, 0.0
    %267 = vadd.xlane.f32.xlu0 %v266
    %v268 = vpop.xlane.xlu0 %267
    %v269 = vsel %vm107, %v259, 0.0
    %270 = vadd.xlane.f32.xlu0 %v269
    %v271 = vpop.xlane.xlu0 %270
    %v272 = vadd.f32 %v262, %v265
    %v273 = vadd.f32 %v272, %v268
    %v274 = vadd.f32 %v273, %v271
    %v275 = vrot.slane %v274, 4
    %v276 = vadd.f32 %v274, %v275
    %v277 = vrot.slane %v276, 2
    %v278 = vadd.f32 %v276, %v277
    %v279 = vrot.slane %v278, 1
    %v280 = vadd.f32 %v278, %v279
    %v281 = vlog2.pop %v96
    %v282 = vmul.f32 %v281, 0.6931472
    %v283 = vsub.f32 -0.9189385, %v282
    %v284 = vsub.f32 %v106, %v69
    %v285 = vmul.f32 %v284, %v284
    %v286 = vmul.f32 %v96, 2.0
    %v287 = vmul.f32 %v286, %v96
    %v288 = vrcp.pop %v287
    %v289 = vmul.f32 %v285, %v288
    %v290 = vsub.f32 %v283, %v289
    %v291 = vsel %vm112, %v290, 0.0
    %292 = vadd.xlane.f32.xlu0 %v291
    %v293 = vpop.xlane.xlu0 %292
    %v294 = vadd.f32 %v293, 0.0
    %v295 = vadd.f32 %v280, %v294
    %296 = vst.msk [vmem:[#allocation8] sm:$0x1] %vm218, %v295
    // Predicated region
    $region34: #{bayesian_layer_forward.2} parent=1 // pred_check
      _
    $region35: #{bayesian_layer_forward.2} parent=1 // pred_check_branch
      %298 = sbr.rel (0) target = $region37
    $region36: #{bayesian_layer_forward.2} parent=1 // pred_region
      _
    $region37: #{bayesian_layer_forward.2} parent=1 // pred_fallthru
      _
    // Predicated region
    $region38: #{bayesian_layer_forward.2} parent=1 // pred_check
      _
    $region39: #{bayesian_layer_forward.2} parent=1 // pred_check_branch
      %300 = sbr.rel (0) target = $region41
    $region40: #{bayesian_layer_forward.2} parent=1 // pred_region
      _
    $region41: #{bayesian_layer_forward.2} parent=1 // pred_fallthru
      _
    // Predicated region
    $region42: #{bayesian_layer_forward.2} parent=1 // pred_check
      _
    $region43: #{bayesian_layer_forward.2} parent=1 // pred_check_branch
      %302 = sbr.rel (0) target = $region45
    $region44: #{bayesian_layer_forward.2} parent=1 // pred_region
      %s304 = ssub.s32 16, 16
      %305 = vsyncadd [#allocation4], %s304
      %s307 = sshll.u32 [#allocation7], 4
      %s308 = int_to_ptr.vmem [resolvable:$true] %s307
      %310 = dma.vmem_to_hbm [thread:$0]  %s308, 16, %s8, [#allocation4]
    $region45: #{bayesian_layer_forward.2} parent=1 // pred_fallthru
      _
    // Predicated region
    $region46: #{bayesian_layer_forward.2} parent=1 // pred_check
      _
    $region47: #{bayesian_layer_forward.2} parent=1 // pred_check_branch
      %312 = sbr.rel (0) target = $region49
    $region48: #{bayesian_layer_forward.2} parent=1 // pred_region
      %s314 = ssub.s32 16, 16
      %315 = vsyncadd [#allocation9], %s314
      %s317 = sshll.u32 [#allocation8], 4
      %s318 = int_to_ptr.vmem [resolvable:$true] %s317
      %320 = dma.vmem_to_hbm [thread:$0]  %s318, 16, %s9, [#allocation9]
    $region49: #{bayesian_layer_forward.2} parent=1 // pred_fallthru
      _
    // Predicated region
    $region50: #{bayesian_layer_forward.2} parent=1 // pred_check
      _
    $region51: #{bayesian_layer_forward.2} parent=1 // pred_check_branch
      %322 = sbr.rel (0) target = $region53
    $region52: #{bayesian_layer_forward.2} parent=1 // pred_region
      _
    $region53: #{bayesian_layer_forward.2} parent=1 // pred_fallthru
      _
    // Predicated region
    $region54: #{bayesian_layer_forward.2} parent=1 // pred_check
      _
    $region55: #{bayesian_layer_forward.2} parent=1 // pred_check_branch
      %324 = sbr.rel (0) target = $region57
    $region56: #{bayesian_layer_forward.2} parent=1 // pred_region
      _
    $region57: #{bayesian_layer_forward.2} parent=1 // pred_fallthru
      _
    // Predicated region
    $region58: #{bayesian_layer_forward.2} parent=1 // pred_check
      _
    $region59: #{bayesian_layer_forward.2} parent=1 // pred_check_branch
      %326 = sbr.rel (0) target = $region61
    $region60: #{bayesian_layer_forward.2} parent=1 // pred_region
      %327 = dma.done [#allocation4], 16
    $region61: #{bayesian_layer_forward.2} parent=1 // pred_fallthru
      _
    // Predicated region
    $region62: #{bayesian_layer_forward.2} parent=1 // pred_check
      _
    $region63: #{bayesian_layer_forward.2} parent=1 // pred_check_branch
      %329 = sbr.rel (0) target = $region65
    $region64: #{bayesian_layer_forward.2} parent=1 // pred_region
      %330 = dma.done [#allocation9], 16
    $region65: #{bayesian_layer_forward.2} parent=1 // pred_fallthru
      _
    %331 = vsyncpa [#allocation3], 1
    %332 = vsyncpa [#allocation6], 1
    %333 = vsyncpa [#allocation4], 1
    %334 = vsyncpa [#allocation9], 1

</llo_original>
